<compile_context>
chip_gen: v6e
topology: v6e:2x2x1
jax: 0.10.0
libtpu: 0.0.40
codegen_flags: <defaults>
</compile_context>

<pallas_src>
import jax
import jax.numpy as jnp
from jax.experimental import pallas as pl
from jax.experimental.pallas import tpu as pltpu


_LANE = 512                             # lane-dense: multiple of 128
_TARGET_BLOCK_BYTES = 2 * 1024 * 1024   # ~2 MiB per block
_SMALL_BYPASS_BYTES = 256 * 1024        # below this, let XLA fuse a plain add


def _merge_up_kernel(a_ref, b_ref, o_ref):
    # Elementwise add on the current VMEM tile (VPU).
    o_ref[...] = a_ref[...] + b_ref[...]


def merge_up(up1: jax.Array, up2: jax.Array, *, force_pallas: bool = False) -> jax.Array:
    """Pallas implementation of MergeUp.forward: up1 + up2.

    The PyTorch module is used with identically-shaped inputs, so broadcasting
    is not supported here.
    """
    assert up1.shape == up2.shape, "MergeUp expects identically-shaped inputs"
    assert up1.dtype == up2.dtype

    orig_shape = up1.shape
    dtype = up1.dtype
    n = 1
    for d in orig_shape:
        n *= d
    if n == 0:
        return up1 + up2
    itemsize = jnp.dtype(dtype).itemsize

    # Tiny-tensor dispatch: a pallas_call launch costs more than moving a few
    # hundred KiB; plain XLA fusion is strictly faster there.
    if not force_pallas and n * itemsize < _SMALL_BYPASS_BYTES:
        return up1 + up2

    lane = _LANE
    rows_raw = pl.cdiv(n, lane)

    # Tile rows: multiple of 8 (sublane), sized for ~2 MiB blocks.  Total
    # pipelined VMEM footprint = 3 arrays x 2 buffers x block ≈ 12 MiB, which
    # fits every generation (incl. v7x's 64 MiB physical / 32 MiB scoped VMEM).
    tile_rows = max(8, _TARGET_BLOCK_BYTES // (lane * itemsize))
    tile_rows -= tile_rows % 8
    if tile_rows > rows_raw:
        tile_rows = ((rows_raw + 7) // 8) * 8

    rows = pl.cdiv(rows_raw, tile_rows) * tile_rows
    padded_n = rows * lane
    pad = padded_n - n

    a = up1.reshape(-1)
    b = up2.reshape(-1)
    if pad:
        a = jnp.pad(a, (0, pad))
        b = jnp.pad(b, (0, pad))
    a2 = a.reshape(rows, lane)
    b2 = b.reshape(rows, lane)

    grid = (rows // tile_rows,)
    in_spec = pl.BlockSpec((tile_rows, lane), lambda i: (i, 0))
    out_spec = pl.BlockSpec((tile_rows, lane), lambda i: (i, 0))

    out2 = pl.pallas_call(
        _merge_up_kernel,
        out_shape=jax.ShapeDtypeStruct((rows, lane), dtype),
        grid_spec=pl.GridSpec(
            grid=grid,
            in_specs=[in_spec, in_spec],
            out_specs=out_spec,
        ),
        compiler_params=pltpu.CompilerParams(
            dimension_semantics=("parallel",),
            vmem_limit_bytes=32 * 1024 * 1024,
        ),
        cost_estimate=pl.CostEstimate(
            flops=n,
            transcendentals=0,
            bytes_accessed=3 * n * itemsize,
        ),
    )(a2, b2)

    out_flat = out2.reshape(-1)
    if pad:
        out_flat = out_flat[:n]
    return out_flat.reshape(orig_shape)


if __name__ == "__main__":
    key = jax.random.PRNGKey(0)
    k1, k2 = jax.random.split(key)
    # NCHW inputs, consistent with a U-Net style "merge up" of two feature maps.
    up1 = jax.random.normal(k1, (2, 4, 16, 16), dtype=jnp.float32)
    up2 = jax.random.normal(k2, (2, 4, 16, 16), dtype=jnp.float32)

    # Force the Pallas path so the kernel itself is exercised even at this
    # small test size (real use would take the jnp.add fast path here).
    out = merge_up(up1, up2, force_pallas=True)
    jax.block_until_ready(out)

    ref = up1 + up2
    assert out.shape == ref.shape and out.dtype == ref.dtype
    assert jnp.allclose(out, ref, atol=1e-6, rtol=1e-6)

    # Also sanity-check the small-tensor bypass path.
    out_bypass = merge_up(up1, up2)
    jax.block_until_ready(out_bypass)
    assert jnp.allclose(out_bypass, ref, atol=1e-6, rtol=1e-6)

    print("KERNEL_OK")
</pallas_src>

<mosaic_0001>
module attributes {stable_mosaic.version = 11 : i64} {
  func.func @_merge_up_kernel(%arg0: i32, %arg1: memref<8x512xf32, #tpu.memory_space<vmem>>, %arg2: memref<8x512xf32, #tpu.memory_space<vmem>>, %arg3: memref<8x512xf32, #tpu.memory_space<vmem>>) attributes {dimension_semantics = [#tpu.dimension_semantics<parallel>], iteration_bounds = array<i64: 1>, scalar_prefetch = 0 : i64, scratch_operands = 0 : i64, tpu.core_type = #tpu.core_type<tc>, window_params = [{transform_indices = @transform_0, window_bounds = array<i64: 8, 512>}, {transform_indices = @transform_1, window_bounds = array<i64: 8, 512>}, {transform_indices = @transform_2, window_bounds = array<i64: 8, 512>}]} {
    %c0 = arith.constant 0 : index
    %c0_0 = arith.constant 0 : index
    %0 = vector.load %arg1[%c0, %c0_0] : memref<8x512xf32, #tpu.memory_space<vmem>>, vector<8x512xf32>
    %c0_1 = arith.constant 0 : index
    %c0_2 = arith.constant 0 : index
    %1 = vector.load %arg2[%c0_1, %c0_2] : memref<8x512xf32, #tpu.memory_space<vmem>>, vector<8x512xf32>
    %2 = arith.addf %0, %1 : vector<8x512xf32>
    %c0_3 = arith.constant 0 : index
    %c0_4 = arith.constant 0 : index
    %3 = vector.load %arg3[%c0_3, %c0_4] : memref<8x512xf32, #tpu.memory_space<vmem>>, vector<8x512xf32>
    tpu.vector_store %arg3[%c0_3, %c0_4], %2 {strides = array<i32>} : memref<8x512xf32, #tpu.memory_space<vmem>>, vector<8x512xf32>,
    return
  }
  func.func @transform_0(%arg0: i32) -> (i32, i32) {
    %c0_i32 = arith.constant 0 : i32
    %c0_i32_0 = arith.constant 0 : i32
    return %arg0, %c0_i32 : i32, i32
  }
  func.func @transform_1(%arg0: i32) -> (i32, i32) {
    %c0_i32 = arith.constant 0 : i32
    %c0_i32_0 = arith.constant 0 : i32
    return %arg0, %c0_i32 : i32, i32
  }
  func.func @transform_2(%arg0: i32) -> (i32, i32) {
    %c0_i32 = arith.constant 0 : i32
    %c0_i32_0 = arith.constant 0 : i32
    return %arg0, %c0_i32 : i32, i32
  }
}

</mosaic_0001>

<llo_original>
// kernel: tpu_custom_call.1
$region0: #{tpu_custom_call.1}
  #allocation0 [shape = 'u32[]', space=smem, size = 0x4, offset = 0x4, fixed_abs, tag = 'smem constant byte address 0x4 - core index']
  #allocation1 [shape = 'u32[144,128]{1,0:T(1,128)}', space=vmem, size = 0x12000, scoped, tag = 'internal scratch']
  %s0 = inlined_call_operand.hbm [shape: f32[8,512], index: 0, kind: input, shape index: {}]
  %s1 = inlined_call_operand.hbm [shape: f32[8,512], index: 1, kind: input, shape index: {}]
  %s2 = inlined_call_operand.hbm [shape: f32[8,512], index: 2, kind: output, shape index: {}]
  %s3 = sld [smem:[#allocation0]]
  $region26: #{tpu_custom_call.1} parent=0
    _
  %s5 = ssub.s32 1, %s3
  %s6 = scalar_select 0, %s5, %s3
  $region1: #{tpu_custom_call.1} parent=0
    #allocation2 [shape = 'u8[16384]{0}', space=vmem, size = 0x4000, scoped, tag = 'input window, operand 0, single buffered']
    #allocation3 [shape = 's32[1]{0}', space=sflag, size = 0x4, scoped, tag = 'scoped memory for tpu_custom_call.1']
    #allocation4 [shape = 's32[1]{0}', space=sflag, size = 0x4, scoped, tag = 'scoped memory for tpu_custom_call.1']
    #allocation5 [shape = 'u8[16384]{0}', space=vmem, size = 0x4000, scoped, tag = 'input window, operand 1, single buffered']
    #allocation6 [shape = 's32[1]{0}', space=sflag, size = 0x4, scoped, tag = 'scoped memory for tpu_custom_call.1']
    #allocation7 [shape = 'u8[16384]{0}', space=vmem, size = 0x4000, scoped, tag = 'output window, operand 0, single buffered']
    %7 = vsyncpa [#allocation3], 0
    %8 = vsyncpa [#allocation6], 0
    %9 = vsyncpa [#allocation4], 0
    // Predicated region
    $region2: #{tpu_custom_call.1} parent=1 // pred_check
      _
    $region3: #{tpu_custom_call.1} parent=1 // pred_check_branch
      %11 = sbr.rel (0) target = $region5
    $region4: #{tpu_custom_call.1} parent=1 // pred_region
      %s13 = ssub.s32 512, 512
      %14 = vsyncadd [#allocation3], %s13
      %s16 = sshll.u32 [#allocation2], 4
      %s17 = int_to_ptr.vmem [resolvable:$true] %s16
      %19 = dma.hbm_to_vmem [thread:$0]  %s0, 512, %s17, [#allocation3]
    $region5: #{tpu_custom_call.1} parent=1 // pred_fallthru
      _
    // Predicated region
    $region6: #{tpu_custom_call.1} parent=1 // pred_check
      _
    $region7: #{tpu_custom_call.1} parent=1 // pred_check_branch
      %21 = sbr.rel (0) target = $region9
    $region8: #{tpu_custom_call.1} parent=1 // pred_region
      %s23 = ssub.s32 512, 512
      %24 = vsyncadd [#allocation6], %s23
      %s26 = sshll.u32 [#allocation5], 4
      %s27 = int_to_ptr.vmem [resolvable:$true] %s26
      %29 = dma.hbm_to_vmem [thread:$0]  %s1, 512, %s27, [#allocation6]
    $region9: #{tpu_custom_call.1} parent=1 // pred_fallthru
      _
    // Predicated region
    $region10: #{tpu_custom_call.1} parent=1 // pred_check
      _
    $region11: #{tpu_custom_call.1} parent=1 // pred_check_branch
      %31 = sbr.rel (0) target = $region13
    $region12: #{tpu_custom_call.1} parent=1 // pred_region
      %32 = dma.done [#allocation3], 512
    $region13: #{tpu_custom_call.1} parent=1 // pred_fallthru
      _
    // Predicated region
    $region14: #{tpu_custom_call.1} parent=1 // pred_check
      _
    $region15: #{tpu_custom_call.1} parent=1 // pred_check_branch
      %34 = sbr.rel (0) target = $region17
    $region16: #{tpu_custom_call.1} parent=1 // pred_region
      %35 = dma.done [#allocation6], 512
    $region17: #{tpu_custom_call.1} parent=1 // pred_fallthru
      _
    %v36 = vld [vmem:[#allocation2] sm:$0xff]
    %v37 = vld [vmem:[#allocation2 + $0x8] sm:$0xff]
    %v38 = vld [vmem:[#allocation2 + $0x10] sm:$0xff]
    %v39 = vld [vmem:[#allocation2 + $0x18] sm:$0xff]
    %v40 = vld [vmem:[#allocation5] sm:$0xff]
    %v41 = vld [vmem:[#allocation5 + $0x8] sm:$0xff]
    %v42 = vld [vmem:[#allocation5 + $0x10] sm:$0xff]
    %v43 = vld [vmem:[#allocation5 + $0x18] sm:$0xff]
    %v44 = vadd.f32 %v36, %v40
    %v45 = vadd.f32 %v37, %v41
    %v46 = vadd.f32 %v38, %v42
    %v47 = vadd.f32 %v39, %v43
    %48 = vst [vmem:[#allocation7] sm:$0xff] %v44
    %49 = vst [vmem:[#allocation7 + $0x8] sm:$0xff] %v45
    %50 = vst [vmem:[#allocation7 + $0x10] sm:$0xff] %v46
    %51 = vst [vmem:[#allocation7 + $0x18] sm:$0xff] %v47
    // Predicated region
    $region18: #{tpu_custom_call.1} parent=1 // pred_check
      _
    $region19: #{tpu_custom_call.1} parent=1 // pred_check_branch
      %53 = sbr.rel (0) target = $region21
    $region20: #{tpu_custom_call.1} parent=1 // pred_region
      %s55 = ssub.s32 512, 512
      %56 = vsyncadd [#allocation4], %s55
      %s58 = sshll.u32 [#allocation7], 4
      %s59 = int_to_ptr.vmem [resolvable:$true] %s58
      %61 = dma.vmem_to_hbm [thread:$0]  %s59, 512, %s2, [#allocation4]
    $region21: #{tpu_custom_call.1} parent=1 // pred_fallthru
      _
    // Predicated region
    $region22: #{tpu_custom_call.1} parent=1 // pred_check
      _
    $region23: #{tpu_custom_call.1} parent=1 // pred_check_branch
      %63 = sbr.rel (0) target = $region25
    $region24: #{tpu_custom_call.1} parent=1 // pred_region
      %64 = dma.done [#allocation4], 512
    $region25: #{tpu_custom_call.1} parent=1 // pred_fallthru
      _
    %65 = vsyncpa [#allocation3], 1
    %66 = vsyncpa [#allocation6], 1
    %67 = vsyncpa [#allocation4], 1

</llo_original>
